<compile_context>
chip_gen: v5e
topology: v5e:2x2
jax: 0.10.0
libtpu: 0.0.40
codegen_flags: <defaults>
</compile_context>

<pallas_src>
import jax
import jax.numpy as jnp
from jax.experimental import pallas as pl
from jax.experimental.pallas import tpu as pltpu


def _round_up(n, m):
    return ((n + m - 1) // m) * m


def ddpg_discrete_kernel(x_ref, w1_ref, b1_ref, w2_ref, b2_ref, w3_ref, b3_ref, out_ref):
    # fc1 + ReLU
    h1 = jnp.dot(x_ref[...], w1_ref[...], preferred_element_type=jnp.float32) + b1_ref[...]
    h1 = jnp.maximum(h1, 0.0)
    # fc2 + ReLU
    h2 = jnp.dot(h1, w2_ref[...], preferred_element_type=jnp.float32) + b2_ref[...]
    h2 = jnp.maximum(h2, 0.0)
    # fc3 (no activation), lane-dense (padded) output
    out_ref[...] = (
        jnp.dot(h2, w3_ref[...], preferred_element_type=jnp.float32) + b3_ref[...]
    ).astype(out_ref.dtype)


def ddpg_discrete_forward(x, params, *, tile_b=None):
    """params = (w1, b1, w2, b2, w3, b3); w_i: (in, out), b_i: (1, out). Returns (batch, action_size) f32."""
    w1, b1, w2, b2, w3, b3 = params
    batch, state_size = x.shape
    H1 = w1.shape[1]
    H2 = w2.shape[1]
    action_size = w3.shape[1]

    # --- lane-dense output: pad final layer's output dim to a multiple of 128 ---
    act_pad = _round_up(action_size, 128)
    if act_pad != action_size:
        w3p = jnp.pad(w3, ((0, 0), (0, act_pad - action_size)))
        b3p = jnp.pad(b3, ((0, 0), (0, act_pad - action_size)))
    else:
        w3p, b3p = w3, b3

    # --- batch tiling: multiple of 8 sublanes, capped at 512 rows per tile ---
    if tile_b is None:
        tile_b = min(512, _round_up(batch, 8))
    tile_b = max(8, _round_up(tile_b, 8))
    padded_batch = _round_up(batch, tile_b)
    xp = jnp.pad(x, ((0, padded_batch - batch), (0, 0))) if padded_batch != batch else x

    grid = (padded_batch // tile_b,)

    def resident(shape):
        # Weights/biases: same block every grid step -> stay pinned in VMEM.
        return pl.BlockSpec(shape, lambda i: (0, 0))

    out = pl.pallas_call(
        ddpg_discrete_kernel,
        out_shape=jax.ShapeDtypeStruct((padded_batch, act_pad), jnp.float32),
        grid=grid,
        in_specs=[
            pl.BlockSpec((tile_b, state_size), lambda i: (i, 0)),  # x: streamed per tile
            resident((state_size, H1)),
            resident((1, H1)),
            resident((H1, H2)),
            resident((1, H2)),
            resident((H2, act_pad)),
            resident((1, act_pad)),
        ],
        out_specs=pl.BlockSpec((tile_b, act_pad), lambda i: (i, 0)),
        compiler_params=pltpu.CompilerParams(
            dimension_semantics=("parallel",),          # megacore split on v7x
            vmem_limit_bytes=32 * 1024 * 1024,          # explicit, safe on v5e/v6e/v7x
        ),
    )(xp, w1, b1, w2, b2, w3p, b3p)

    # Slice padding (batch rows and padded action columns) back off.
    return out[:batch, :action_size]


def init_params(key, state_size, action_size, H1=64, H2=64):
    """Deterministic init mimicking PyTorch nn.Linear default: U(-1/sqrt(fan_in), 1/sqrt(fan_in))."""
    keys = jax.random.split(key, 6)

    def linear(kw, kb, fan_in, fan_out):
        bound = 1.0 / jnp.sqrt(jnp.float32(fan_in))
        # stored as (in, out): transpose of PyTorch's (out, in) weight
        w = jax.random.uniform(kw, (fan_in, fan_out), jnp.float32, -bound, bound)
        b = jax.random.uniform(kb, (1, fan_out), jnp.float32, -bound, bound)
        return w, b

    w1, b1 = linear(keys[0], keys[1], state_size, H1)
    w2, b2 = linear(keys[2], keys[3], H1, H2)
    w3, b3 = linear(keys[4], keys[5], H2, action_size)
    return (w1, b1, w2, b2, w3, b3)


def _reference(x, params):
    w1, b1, w2, b2, w3, b3 = params
    h = jnp.maximum(x @ w1 + b1, 0.0)
    h = jnp.maximum(h @ w2 + b2, 0.0)
    return h @ w3 + b3


if __name__ == "__main__":
    state_size = 16
    action_size = 8
    batch = 2

    key = jax.random.PRNGKey(0)
    k_param, k_x, k_x2 = jax.random.split(key, 3)

    params = init_params(k_param, state_size, action_size, H1=64, H2=64)

    # Small-batch check (batch=2 pads to one 8-row tile).
    x = jax.random.normal(k_x, (batch, state_size), dtype=jnp.float32)
    out = ddpg_discrete_forward(x, params)
    jax.block_until_ready(out)
    ref = _reference(x, params)
    assert out.shape == (batch, action_size)
    assert jnp.allclose(out, ref, atol=1e-5, rtol=1e-5)

    # Multi-tile grid check (exercises batch padding + "parallel" grid axis).
    x2 = jax.random.normal(k_x2, (300, state_size), dtype=jnp.float32)
    out2 = ddpg_discrete_forward(x2, params, tile_b=128)
    jax.block_until_ready(out2)
    ref2 = _reference(x2, params)
    assert out2.shape == (300, action_size)
    assert jnp.allclose(out2, ref2, atol=1e-5, rtol=1e-5)

    print("KERNEL_OK")
</pallas_src>

<mosaic_0001>
module attributes {stable_mosaic.version = 11 : i64} {
  func.func @ddpg_discrete_kernel(%arg0: i32, %arg1: memref<8x16xf32, #tpu.memory_space<vmem>>, %arg2: memref<16x64xf32, #tpu.memory_space<vmem>>, %arg3: memref<1x64xf32, #tpu.memory_space<vmem>>, %arg4: memref<64x64xf32, #tpu.memory_space<vmem>>, %arg5: memref<1x64xf32, #tpu.memory_space<vmem>>, %arg6: memref<64x128xf32, #tpu.memory_space<vmem>>, %arg7: memref<1x128xf32, #tpu.memory_space<vmem>>, %arg8: memref<8x128xf32, #tpu.memory_space<vmem>>) attributes {dimension_semantics = [#tpu.dimension_semantics<parallel>], iteration_bounds = array<i64: 1>, scalar_prefetch = 0 : i64, scratch_operands = 0 : i64, tpu.core_type = #tpu.core_type<tc>, window_params = [{transform_indices = @transform_0, window_bounds = array<i64: 8, 16>}, {pipeline_mode = #tpu.pipeline_mode<synchronous>, transform_indices = @transform_1, window_bounds = array<i64: 16, 64>}, {pipeline_mode = #tpu.pipeline_mode<synchronous>, transform_indices = @transform_2, window_bounds = array<i64: 1, 64>}, {pipeline_mode = #tpu.pipeline_mode<synchronous>, transform_indices = @transform_3, window_bounds = array<i64: 64, 64>}, {pipeline_mode = #tpu.pipeline_mode<synchronous>, transform_indices = @transform_4, window_bounds = array<i64: 1, 64>}, {pipeline_mode = #tpu.pipeline_mode<synchronous>, transform_indices = @transform_5, window_bounds = array<i64: 64, 128>}, {pipeline_mode = #tpu.pipeline_mode<synchronous>, transform_indices = @transform_6, window_bounds = array<i64: 1, 128>}, {transform_indices = @transform_7, window_bounds = array<i64: 8, 128>}]} {
    %c0 = arith.constant 0 : index
    %c0_0 = arith.constant 0 : index
    %0 = vector.load %arg1[%c0, %c0_0] : memref<8x16xf32, #tpu.memory_space<vmem>>, vector<8x16xf32>
    %c0_1 = arith.constant 0 : index
    %c0_2 = arith.constant 0 : index
    %1 = vector.load %arg2[%c0_1, %c0_2] : memref<16x64xf32, #tpu.memory_space<vmem>>, vector<16x64xf32>
    %cst = arith.constant dense<0.000000e+00> : vector<8x64xf32>
    %2 = tpu.matmul %0, %1, %cst {dimension_numbers = #tpu.dot_dimension_numbers<[1], [0], [0], [1], [0, 0, 1, 1], [], []>} : vector<8x16xf32>, vector<16x64xf32>, vector<8x64xf32> -> vector<8x64xf32>
    %c0_3 = arith.constant 0 : index
    %c0_4 = arith.constant 0 : index
    %3 = vector.load %arg3[%c0_3, %c0_4] : memref<1x64xf32, #tpu.memory_space<vmem>>, vector<1x64xf32>
    %4 = vector.broadcast %3 : vector<1x64xf32> to vector<8x64xf32>
    %5 = arith.addf %2, %4 : vector<8x64xf32>
    %cst_5 = arith.constant 0.000000e+00 : f32
    %6 = vector.broadcast %cst_5 : f32 to vector<8x64xf32>
    %7 = arith.maximumf %5, %6 : vector<8x64xf32>
    %c0_6 = arith.constant 0 : index
    %c0_7 = arith.constant 0 : index
    %8 = vector.load %arg4[%c0_6, %c0_7] : memref<64x64xf32, #tpu.memory_space<vmem>>, vector<64x64xf32>
    %cst_8 = arith.constant dense<0.000000e+00> : vector<8x64xf32>
    %9 = tpu.matmul %7, %8, %cst_8 {dimension_numbers = #tpu.dot_dimension_numbers<[1], [0], [0], [1], [0, 0, 1, 1], [], []>} : vector<8x64xf32>, vector<64x64xf32>, vector<8x64xf32> -> vector<8x64xf32>
    %c0_9 = arith.constant 0 : index
    %c0_10 = arith.constant 0 : index
    %10 = vector.load %arg5[%c0_9, %c0_10] : memref<1x64xf32, #tpu.memory_space<vmem>>, vector<1x64xf32>
    %11 = vector.broadcast %10 : vector<1x64xf32> to vector<8x64xf32>
    %12 = arith.addf %9, %11 : vector<8x64xf32>
    %cst_11 = arith.constant 0.000000e+00 : f32
    %13 = vector.broadcast %cst_11 : f32 to vector<8x64xf32>
    %14 = arith.maximumf %12, %13 : vector<8x64xf32>
    %c0_12 = arith.constant 0 : index
    %c0_13 = arith.constant 0 : index
    %15 = vector.load %arg6[%c0_12, %c0_13] : memref<64x128xf32, #tpu.memory_space<vmem>>, vector<64x128xf32>
    %cst_14 = arith.constant dense<0.000000e+00> : vector<8x128xf32>
    %16 = tpu.matmul %14, %15, %cst_14 {dimension_numbers = #tpu.dot_dimension_numbers<[1], [0], [0], [1], [0, 0, 1, 1], [], []>} : vector<8x64xf32>, vector<64x128xf32>, vector<8x128xf32> -> vector<8x128xf32>
    %c0_15 = arith.constant 0 : index
    %c0_16 = arith.constant 0 : index
    %17 = vector.load %arg7[%c0_15, %c0_16] : memref<1x128xf32, #tpu.memory_space<vmem>>, vector<1x128xf32>
    %18 = vector.broadcast %17 : vector<1x128xf32> to vector<8x128xf32>
    %19 = arith.addf %16, %18 : vector<8x128xf32>
    %c0_17 = arith.constant 0 : index
    %c0_18 = arith.constant 0 : index
    %20 = vector.load %arg8[%c0_17, %c0_18] : memref<8x128xf32, #tpu.memory_space<vmem>>, vector<8x128xf32>
    tpu.vector_store %arg8[%c0_17, %c0_18], %19 {strides = array<i32>} : memref<8x128xf32, #tpu.memory_space<vmem>>, vector<8x128xf32>,
    return
  }
  func.func @transform_0(%arg0: i32) -> (i32, i32) {
    %c0_i32 = arith.constant 0 : i32
    %c0_i32_0 = arith.constant 0 : i32
    return %arg0, %c0_i32 : i32, i32
  }
  func.func @transform_1(%arg0: i32) -> (i32, i32) {
    %c0_i32 = arith.constant 0 : i32
    %c0_i32_0 = arith.constant 0 : i32
    %c0_i32_1 = arith.constant 0 : i32
    return %c0_i32, %c0_i32_0 : i32, i32
  }
  func.func @transform_2(%arg0: i32) -> (i32, i32) {
    %c0_i32 = arith.constant 0 : i32
    %c0_i32_0 = arith.constant 0 : i32
    %c0_i32_1 = arith.constant 0 : i32
    return %c0_i32, %c0_i32_0 : i32, i32
  }
  func.func @transform_3(%arg0: i32) -> (i32, i32) {
    %c0_i32 = arith.constant 0 : i32
    %c0_i32_0 = arith.constant 0 : i32
    %c0_i32_1 = arith.constant 0 : i32
    return %c0_i32, %c0_i32_0 : i32, i32
  }
  func.func @transform_4(%arg0: i32) -> (i32, i32) {
    %c0_i32 = arith.constant 0 : i32
    %c0_i32_0 = arith.constant 0 : i32
    %c0_i32_1 = arith.constant 0 : i32
    return %c0_i32, %c0_i32_0 : i32, i32
  }
  func.func @transform_5(%arg0: i32) -> (i32, i32) {
    %c0_i32 = arith.constant 0 : i32
    %c0_i32_0 = arith.constant 0 : i32
    %c0_i32_1 = arith.constant 0 : i32
    return %c0_i32, %c0_i32_0 : i32, i32
  }
  func.func @transform_6(%arg0: i32) -> (i32, i32) {
    %c0_i32 = arith.constant 0 : i32
    %c0_i32_0 = arith.constant 0 : i32
    %c0_i32_1 = arith.constant 0 : i32
    return %c0_i32, %c0_i32_0 : i32, i32
  }
  func.func @transform_7(%arg0: i32) -> (i32, i32) {
    %c0_i32 = arith.constant 0 : i32
    %c0_i32_0 = arith.constant 0 : i32
    return %arg0, %c0_i32 : i32, i32
  }
}

</mosaic_0001>

<llo_original>
// kernel: tpu_custom_call.1
$region0: #{tpu_custom_call.1}
  #allocation0 [shape = 'u32[]', space=smem, size = 0x4, offset = 0x4, fixed_abs, tag = 'smem constant byte address 0x4 - core index']
  #allocation1 [shape = 'u32[72,128]{1,0:T(1,128)}', space=vmem, size = 0x9000, scoped, tag = 'internal scratch']
  %s0 = inlined_call_operand.hbm [shape: f32[8,16], index: 0, kind: input, shape index: {}]
  %s1 = inlined_call_operand.hbm [shape: f32[16,64], index: 1, kind: input, shape index: {}]
  %s2 = inlined_call_operand.vmem [shape: f32[1,64], index: 2, kind: input, shape index: {}]
  %s3 = inlined_call_operand.hbm [shape: f32[64,64], index: 3, kind: input, shape index: {}]
  %s4 = inlined_call_operand.vmem [shape: f32[1,64], index: 4, kind: input, shape index: {}]
  %s5 = inlined_call_operand.hbm [shape: f32[64,128], index: 5, kind: input, shape index: {}]
  %s6 = inlined_call_operand.vmem [shape: f32[1,128], index: 6, kind: input, shape index: {}]
  %s7 = inlined_call_operand.hbm [shape: f32[8,128], index: 7, kind: output, shape index: {}]
  %s8 = sld [smem:[#allocation0]]
  $region54: #{tpu_custom_call.1} parent=0
    _
  %s10 = ssub.s32 1, %s8
  %s11 = scalar_select 0, %s10, %s8
  $region1: #{tpu_custom_call.1} parent=0
    #allocation2 [shape = 'u8[4096]{0}', space=vmem, size = 0x1000, scoped, tag = 'input window, operand 0, single buffered']
    #allocation3 [shape = 's32[1]{0}', space=sflag, size = 0x4, scoped, tag = 'scoped memory for tpu_custom_call.1']
    #allocation4 [shape = 's32[1]{0}', space=sflag, size = 0x4, scoped, tag = 'scoped memory for tpu_custom_call.1']
    #allocation5 [shape = 'u8[8192]{0}', space=vmem, size = 0x2000, scoped, tag = 'input window, operand 1, single buffered']
    #allocation6 [shape = 's32[1]{0}', space=sflag, size = 0x4, scoped, tag = 'scoped memory for tpu_custom_call.1']
    #allocation7 [shape = 'u8[32768]{0}', space=vmem, size = 0x8000, scoped, tag = 'input window, operand 3, single buffered']
    #allocation8 [shape = 'u8[32768]{0}', space=vmem, size = 0x8000, scoped, tag = 'input window, operand 5, single buffered']
    #allocation9 [shape = 's32[1]{0}', space=sflag, size = 0x4, scoped, tag = 'scoped memory for tpu_custom_call.1']
    #allocation10 [shape = 'u8[4096]{0}', space=vmem, size = 0x1000, scoped, tag = 'output window, operand 0, single buffered']
    %12 = vsyncpa [#allocation3], 0
    %13 = vsyncpa [#allocation6], 0
    %14 = vsyncpa [#allocation9], 0
    %15 = vsyncpa [#allocation4], 0
    // Predicated region
    $region2: #{tpu_custom_call.1} parent=1 // pred_check
      _
    $region3: #{tpu_custom_call.1} parent=1 // pred_check_branch
      %17 = sbr.rel (0) target = $region5
    $region4: #{tpu_custom_call.1} parent=1 // pred_region
      %19 = vsyncadd [#allocation3], 0
      %s21 = sshll.u32 %s0, 4
      %s22 = int_to_ptr.hbm [resolvable:$true] %s21
      %s23 = sshll.u32 [#allocation2], 4
      %s24 = int_to_ptr.vmem [resolvable:$true] %s23
      %26 = dma.hbm_to_vmem [thread:$0]  %s22, 128, %s24, [#allocation3]
    $region5: #{tpu_custom_call.1} parent=1 // pred_fallthru
      _
    // Predicated region
    $region6: #{tpu_custom_call.1} parent=1 // pred_check
      _
    $region7: #{tpu_custom_call.1} parent=1 // pred_check_branch
      %28 = sbr.rel (0) target = $region9
    $region8: #{tpu_custom_call.1} parent=1 // pred_region
      %30 = vsyncadd [#allocation6], 0
      %s31 = sshll.u32 %s1, 4
      %s32 = int_to_ptr.hbm [resolvable:$true] %s31
      %s33 = sshll.u32 [#allocation5], 4
      %s34 = int_to_ptr.vmem [resolvable:$true] %s33
      %39 = dma.hbm_to_vmem [thread:$0]  %s32, 256, %s34, [#allocation6], 128, 128, 8
    $region9: #{tpu_custom_call.1} parent=1 // pred_fallthru
      _
    // Predicated region
    $region10: #{tpu_custom_call.1} parent=1 // pred_check
      _
    $region11: #{tpu_custom_call.1} parent=1 // pred_check_branch
      %41 = sbr.rel (0) target = $region13
    $region12: #{tpu_custom_call.1} parent=1 // pred_region
      _
    $region13: #{tpu_custom_call.1} parent=1 // pred_fallthru
      _
    // Predicated region
    $region14: #{tpu_custom_call.1} parent=1 // pred_check
      _
    $region15: #{tpu_custom_call.1} parent=1 // pred_check_branch
      %43 = sbr.rel (0) target = $region17
    $region16: #{tpu_custom_call.1} parent=1 // pred_region
      %45 = vsyncadd [#allocation6], 0
      %s46 = sshll.u32 %s3, 4
      %s47 = int_to_ptr.hbm [resolvable:$true] %s46
      %s48 = sshll.u32 [#allocation7], 4
      %s49 = int_to_ptr.vmem [resolvable:$true] %s48
      %54 = dma.hbm_to_vmem [thread:$0]  %s47, 1024, %s49, [#allocation6], 128, 128, 8
    $region17: #{tpu_custom_call.1} parent=1 // pred_fallthru
      _
    // Predicated region
    $region18: #{tpu_custom_call.1} parent=1 // pred_check
      _
    $region19: #{tpu_custom_call.1} parent=1 // pred_check_branch
      %56 = sbr.rel (0) target = $region21
    $region20: #{tpu_custom_call.1} parent=1 // pred_region
      _
    $region21: #{tpu_custom_call.1} parent=1 // pred_fallthru
      _
    // Predicated region
    $region22: #{tpu_custom_call.1} parent=1 // pred_check
      _
    $region23: #{tpu_custom_call.1} parent=1 // pred_check_branch
      %58 = sbr.rel (0) target = $region25
    $region24: #{tpu_custom_call.1} parent=1 // pred_region
      %60 = vsyncadd [#allocation9], 0
      %s61 = sshll.u32 %s5, 4
      %s62 = int_to_ptr.hbm [resolvable:$true] %s61
      %s63 = sshll.u32 [#allocation8], 4
      %s64 = int_to_ptr.vmem [resolvable:$true] %s63
      %69 = dma.hbm_to_vmem [thread:$0]  %s62, 1024, %s64, [#allocation9], 128, 128, 8
    $region25: #{tpu_custom_call.1} parent=1 // pred_fallthru
      _
    // Predicated region
    $region26: #{tpu_custom_call.1} parent=1 // pred_check
      _
    $region27: #{tpu_custom_call.1} parent=1 // pred_check_branch
      %71 = sbr.rel (0) target = $region29
    $region28: #{tpu_custom_call.1} parent=1 // pred_region
      _
    $region29: #{tpu_custom_call.1} parent=1 // pred_fallthru
      _
    // Predicated region
    $region30: #{tpu_custom_call.1} parent=1 // pred_check
      _
    $region31: #{tpu_custom_call.1} parent=1 // pred_check_branch
      %73 = sbr.rel (0) target = $region33
    $region32: #{tpu_custom_call.1} parent=1 // pred_region
      %75 = dma.done [#allocation3], 128
    $region33: #{tpu_custom_call.1} parent=1 // pred_fallthru
      _
    // Predicated region
    $region34: #{tpu_custom_call.1} parent=1 // pred_check
      _
    $region35: #{tpu_custom_call.1} parent=1 // pred_check_branch
      %77 = sbr.rel (0) target = $region37
    $region36: #{tpu_custom_call.1} parent=1 // pred_region
      %79 = dma.done [#allocation6], 256
    $region37: #{tpu_custom_call.1} parent=1 // pred_fallthru
      _
    // Predicated region
    $region38: #{tpu_custom_call.1} parent=1 // pred_check
      _
    $region39: #{tpu_custom_call.1} parent=1 // pred_check_branch
      %81 = sbr.rel (0) target = $region41
    $region40: #{tpu_custom_call.1} parent=1 // pred_region
      %83 = dma.done [#allocation6], 1024
    $region41: #{tpu_custom_call.1} parent=1 // pred_fallthru
      _
    // Predicated region
    $region42: #{tpu_custom_call.1} parent=1 // pred_check
      _
    $region43: #{tpu_custom_call.1} parent=1 // pred_check_branch
      %85 = sbr.rel (0) target = $region45
    $region44: #{tpu_custom_call.1} parent=1 // pred_region
      %87 = dma.done [#allocation9], 1024
    $region45: #{tpu_custom_call.1} parent=1 // pred_fallthru
      _
    %v88 = vld [vmem:[#allocation2] sm:$0xff]
    %v89 = vld [vmem:[#allocation5] sm:$0xff]
    %v90 = vld [vmem:[#allocation5 + $0x8] sm:$0xff]
    %v91 = vld [vmem:[%s2] sm:$0x1]
    %v93 = vperm.slane %v91, 0
    %vm95 = vcmask 130048
    %v97 = vsel %vm95, %v88, 0
    %99 = vmatpush.msra.mxu0 0.0
    %100 = vmatpush.msra.mxu0 0.0
    %101 = vmatpush.msra.mxu0 0.0
    %102 = vmatpush.msra.mxu0 0.0
    %103 = vmatpush.msra.mxu0 0.0
    %104 = vmatpush.msra.mxu0 0.0
    %105 = vmatpush.msra.mxu0 0.0
    %106 = vmatpush.msra.mxu0 0.0
    %107 = vmatpush.msra.mxu0 0.0
    %108 = vmatpush.msra.mxu0 0.0
    %109 = vmatpush.msra.mxu0 0.0
    %110 = vmatpush.msra.mxu0 0.0
    %111 = vmatpush.msra.mxu0 0.0
    %112 = vmatpush.msra.mxu0 0.0
    %113 = vmatpush.msra.mxu0 %v90
    %114 = vmatpush.msra.mxu0 %v89
    %115 = vmatmul.f32.gmra.mxu0 %v97
    %v116 = vpop.f32.mrf.mxu0
    %v117 = vadd.f32 %v93, %v116
    %118 = vdwg.mxu0
    %v119 = vmax.f32 %v117, 0.0
    %v120 = vld [vmem:[#allocation7] sm:$0xff]
    %v121 = vld [vmem:[#allocation7 + $0x8] sm:$0xff]
    %v122 = vld [vmem:[#allocation7 + $0x10] sm:$0xff]
    %v123 = vld [vmem:[#allocation7 + $0x18] sm:$0xff]
    %v124 = vld [vmem:[#allocation7 + $0x20] sm:$0xff]
    %v125 = vld [vmem:[#allocation7 + $0x28] sm:$0xff]
    %v126 = vld [vmem:[#allocation7 + $0x30] sm:$0xff]
    %v127 = vld [vmem:[#allocation7 + $0x38] sm:$0xff]
    %v128 = vld [vmem:[%s4] sm:$0x1]
    %v130 = vperm.slane %v128, 0
    %vm132 = vcmask 523264
    %v134 = vsel %vm132, %v119, 0
    %136 = vmatpush.msra.mxu0 0.0
    %137 = vmatpush.msra.mxu0 0.0
    %138 = vmatpush.msra.mxu0 0.0
    %139 = vmatpush.msra.mxu0 0.0
    %140 = vmatpush.msra.mxu0 0.0
    %141 = vmatpush.msra.mxu0 0.0
    %142 = vmatpush.msra.mxu0 0.0
    %143 = vmatpush.msra.mxu0 0.0
    %144 = vmatpush.msra.mxu0 %v127
    %145 = vmatpush.msra.mxu0 %v126
    %146 = vmatpush.msra.mxu0 %v125
    %147 = vmatpush.msra.mxu0 %v124
    %148 = vmatpush.msra.mxu0 %v123
    %149 = vmatpush.msra.mxu0 %v122
    %150 = vmatpush.msra.mxu0 %v121
    %151 = vmatpush.msra.mxu0 %v120
    %152 = vmatmul.f32.gmra.mxu0 %v134
    %v153 = vpop.f32.mrf.mxu0
    %v154 = vadd.f32 %v130, %v153
    %155 = vdwg.mxu0
    %v156 = vmax.f32 %v154, 0.0
    %v157 = vld [vmem:[#allocation8] sm:$0xff]
    %v158 = vld [vmem:[#allocation8 + $0x8] sm:$0xff]
    %v159 = vld [vmem:[#allocation8 + $0x10] sm:$0xff]
    %v160 = vld [vmem:[#allocation8 + $0x18] sm:$0xff]
    %v161 = vld [vmem:[#allocation8 + $0x20] sm:$0xff]
    %v162 = vld [vmem:[#allocation8 + $0x28] sm:$0xff]
    %v163 = vld [vmem:[#allocation8 + $0x30] sm:$0xff]
    %v164 = vld [vmem:[#allocation8 + $0x38] sm:$0xff]
    %v165 = vld [vmem:[%s6] sm:$0x1]
    %v167 = vperm.slane %v165, 0
    %v170 = vsel %vm132, %v156, 0
    %172 = vmatpush.msra.mxu0 0.0
    %173 = vmatpush.msra.mxu0 0.0
    %174 = vmatpush.msra.mxu0 0.0
    %175 = vmatpush.msra.mxu0 0.0
    %176 = vmatpush.msra.mxu0 0.0
    %177 = vmatpush.msra.mxu0 0.0
    %178 = vmatpush.msra.mxu0 0.0
    %179 = vmatpush.msra.mxu0 0.0
    %180 = vmatpush.msra.mxu0 %v164
    %181 = vmatpush.msra.mxu0 %v163
    %182 = vmatpush.msra.mxu0 %v162
    %183 = vmatpush.msra.mxu0 %v161
    %184 = vmatpush.msra.mxu0 %v160
    %185 = vmatpush.msra.mxu0 %v159
    %186 = vmatpush.msra.mxu0 %v158
    %187 = vmatpush.msra.mxu0 %v157
    %188 = vmatmul.f32.gmra.mxu0 %v170
    %v189 = vpop.f32.mrf.mxu0
    %v190 = vadd.f32 %v167, %v189
    %191 = vdwg.mxu0
    %192 = vst [vmem:[#allocation10] sm:$0xff] %v190
    // Predicated region
    $region46: #{tpu_custom_call.1} parent=1 // pred_check
      _
    $region47: #{tpu_custom_call.1} parent=1 // pred_check_branch
      %194 = sbr.rel (0) target = $region49
    $region48: #{tpu_custom_call.1} parent=1 // pred_region
      %196 = vsyncadd [#allocation4], 0
      %s198 = sshll.u32 [#allocation10], 4
      %s199 = int_to_ptr.vmem [resolvable:$true] %s198
      %s200 = sshll.u32 %s7, 4
      %s201 = int_to_ptr.hbm [resolvable:$true] %s200
      %203 = dma.vmem_to_hbm [thread:$0]  %s199, 128, %s201, [#allocation4]
    $region49: #{tpu_custom_call.1} parent=1 // pred_fallthru
      _
    // Predicated region
    $region50: #{tpu_custom_call.1} parent=1 // pred_check
      _
    $region51: #{tpu_custom_call.1} parent=1 // pred_check_branch
      %205 = sbr.rel (0) target = $region53
    $region52: #{tpu_custom_call.1} parent=1 // pred_region
      %207 = dma.done [#allocation4], 128
    $region53: #{tpu_custom_call.1} parent=1 // pred_fallthru
      _
    %208 = vsyncpa [#allocation3], 1
    %209 = vsyncpa [#allocation6], 1
    %210 = vsyncpa [#allocation9], 1
    %211 = vsyncpa [#allocation4], 1

</llo_original>
